<compile_context>
chip_gen: v6e
topology: v6e:2x2x1
jax: 0.10.0
libtpu: 0.0.40
codegen_flags: <defaults>
</compile_context>

<pallas_src>
import functools

import jax
import jax.numpy as jnp
from jax.experimental import pallas as pl
from jax.experimental.pallas import tpu as pltpu


def _wdsr_block_kernel(x_ref, w1_ref, b1_ref, w2_ref, b2_ref, out_ref,
                       *, H, W, K, pad, Cin, Cmid, bn, res_scale, mm_dtype):
    """One batch block (bn images) per grid step.

    x_ref   : (bn*Cin, H*W)   f32-ish, rows ordered (image, channel)
    w1_ref  : (Cmid, K*K*Cin) mm_dtype, columns ordered (dy, dx, ci)
    b1_ref  : (Cmid, 1)       f32
    w2_ref  : (Cin, K*K*Cmid) mm_dtype, columns ordered (dy, dx, cm)
    b2_ref  : (Cin, 1)        f32
    out_ref : (bn*Cin, H*W)
    """
    HW = H * W
    f32 = jnp.float32
    # Flat zero pad of >= pad*(W+1) lanes handles every vertical border;
    # round it up to 128 so the pad concat is vreg-aligned (free placement).
    P = pad * (W + 1)
    PADL = ((P + 127) // 128) * 128

    # Hoisted 0/1 horizontal-border planes (vertical overruns land in the
    # flat zero pad; these planes also kill the row-to-row wraparound).
    colx = jax.lax.broadcasted_iota(jnp.int32, (1, HW), 1) % W
    hmask = {ox: jnp.where((colx >= -ox) & (colx < W - ox), 1.0, 0.0)
             for ox in range(-pad, pad + 1) if ox != 0}

    def im2col(imgs, C):
        # imgs: list of bn lane-dense (C, HW) f32 images.  Returns the
        # (K*K*C, bn*HW) patch matrix, built fully in-register from static
        # lane-shifted slices of a flat-padded copy of each image.
        hm = {ox: jnp.broadcast_to(hmask[ox], (C, HW)) for ox in hmask}
        zp = jnp.zeros((C, PADL), f32)
        xes = [jnp.concatenate([zp, xi, zp], axis=1) for xi in imgs]
        rows = []
        for dy in range(K):
            for dx in range(K):
                ox = dx - pad
                s = (dy - pad) * W + ox
                taps = []
                for xe in xes:
                    sl = xe[:, PADL + s: PADL + s + HW]        # (C, HW)
                    if ox != 0:
                        sl = sl * hm[ox]
                    taps.append(sl)
                rows.append(taps[0] if bn == 1
                            else jnp.concatenate(taps, axis=1))
        return jnp.concatenate(rows, axis=0).astype(mm_dtype)

    x = x_ref[...].astype(f32)                                 # (bn*Cin, HW)
    imgs_in = [x[i * Cin:(i + 1) * Cin, :] for i in range(bn)]

    # ---- conv1 (Cin -> Cmid): one MXU contraction, depth K*K*Cin ----
    a1 = jnp.dot(w1_ref[...], im2col(imgs_in, Cin),
                 preferred_element_type=f32)                   # (Cmid, bn*HW)
    act = jnp.maximum(a1 + b1_ref[...], 0.0)                   # f32

    # ---- conv2 (Cmid -> Cin): one MXU contraction, depth K*K*Cmid ----
    imgs_mid = [act[:, i * HW:(i + 1) * HW] for i in range(bn)]
    a2 = jnp.dot(w2_ref[...], im2col(imgs_mid, Cmid),
                 preferred_element_type=f32)                   # (Cin, bn*HW)
    body = a2 + b2_ref[...]

    # ---- residual: res_scale * body(x) + x, packed back to (bn*Cin, HW) ----
    outs = [body[:, i * HW:(i + 1) * HW] * res_scale + imgs_in[i]
            for i in range(bn)]
    res = outs[0] if bn == 1 else jnp.concatenate(outs, axis=0)
    out_ref[...] = res.astype(out_ref.dtype)                   # aligned store


def _pick_batch_block(n, cin, cmid, k, hw, vmem_budget=8 << 20):
    """Images per grid step: blocks must be sublane-aligned ((bn*cin) % 8 == 0
    or the full batch), prefer >=2 grid steps (v7x megacore) and bound the
    per-step im2col footprint."""
    divisors = [b for b in range(1, n + 1) if n % b == 0]
    valid = [b for b in divisors if (b * cin) % 8 == 0 or b == n]

    def step_bytes(b):
        col = k * k * (cin + cmid) * b * hw * 2        # bf16 im2col values
        act = (2 * cin + cmid) * b * hw * 4            # x / act / out in f32
        return col + act

    fit = [b for b in valid if step_bytes(b) <= vmem_budget] or [min(valid)]
    multi = [b for b in fit if n // b >= 2]
    return max(multi) if multi else max(fit)


def wdsr_block(x_nchw, w1_oihw, b1, w2_oihw, b2, res_scale=1.0,
               matmul_dtype=jnp.bfloat16):
    """x: (N, Cin, H, W) NCHW (PyTorch layout); weights OIHW; returns NCHW."""
    N, Cin, H, W = x_nchw.shape
    Cmid, _, K, _ = w1_oihw.shape
    pad = K // 2
    HW = H * W
    bn = _pick_batch_block(N, Cin, Cmid, K, HW)

    # Lane-dense, channel-folded layout: pure reshape, no HBM round trip.
    x2d = x_nchw.reshape(N * Cin, HW)

    # Fold the K*K taps into the contraction dim, ordered (dy, dx, cin);
    # matmul operands in bf16 (v6e/v7x native MXU rate), biases stay f32.
    w1r = jnp.transpose(w1_oihw, (0, 2, 3, 1)).reshape(Cmid, K * K * Cin)
    w2r = jnp.transpose(w2_oihw, (0, 2, 3, 1)).reshape(Cin, K * K * Cmid)
    w1r = w1r.astype(matmul_dtype)
    w2r = w2r.astype(matmul_dtype)
    b1c = b1.reshape(Cmid, 1).astype(jnp.float32)
    b2c = b2.reshape(Cin, 1).astype(jnp.float32)

    kernel = functools.partial(
        _wdsr_block_kernel, H=H, W=W, K=K, pad=pad, Cin=Cin, Cmid=Cmid,
        bn=bn, res_scale=float(res_scale), mm_dtype=matmul_dtype)

    flops = 4 * N * HW * K * K * Cin * Cmid            # the two convolutions
    bytes_accessed = (2 * N * Cin * HW * x_nchw.dtype.itemsize
                      + w1r.size * w1r.dtype.itemsize
                      + w2r.size * w2r.dtype.itemsize
                      + (Cmid + Cin) * 4)

    out2d = pl.pallas_call(
        kernel,
        out_shape=jax.ShapeDtypeStruct((N * Cin, HW), x_nchw.dtype),
        grid_spec=pltpu.PrefetchScalarGridSpec(
            num_scalar_prefetch=0,
            grid=(N // bn,),
            in_specs=[
                # per-step lane-dense activation slab (bn images)
                pl.BlockSpec((bn * Cin, HW), lambda n: (n, 0)),
                # weights / biases: full arrays, same block every step
                pl.BlockSpec((Cmid, K * K * Cin), lambda n: (0, 0)),
                pl.BlockSpec((Cmid, 1), lambda n: (0, 0)),
                pl.BlockSpec((Cin, K * K * Cmid), lambda n: (0, 0)),
                pl.BlockSpec((Cin, 1), lambda n: (0, 0)),
            ],
            out_specs=pl.BlockSpec((bn * Cin, HW), lambda n: (n, 0)),
        ),
        compiler_params=pltpu.CompilerParams(
            dimension_semantics=("parallel",)),
        cost_estimate=pl.CostEstimate(
            flops=flops, transcendentals=0, bytes_accessed=bytes_accessed),
    )(x2d, w1r, b1c, w2r, b2c)

    return out2d.reshape(N, Cin, H, W)


def weight_norm(v, g):
    """PyTorch nn.utils.weight_norm with default dim=0: w = g * v / ||v||.

    v: (O, I, kh, kw), g: (O,); norm taken over (I, kh, kw) per output chan.
    """
    norm = jnp.sqrt(jnp.sum(v * v, axis=(1, 2, 3), keepdims=True))
    return g.reshape(-1, 1, 1, 1) * v / norm


if __name__ == "__main__":
    # Small shapes consistent with the module: n_feats=4, block_feats=8, k=3.
    N, Cin, H, W = 2, 4, 16, 16
    Cmid, K = 8, 3
    res_scale = 1.0

    key = jax.random.PRNGKey(0)
    k1, k2, k3, k4, k5, k6, kx = jax.random.split(key, 7)

    # Deterministic synthetic parameters (weight-norm parameterization v, g).
    v1 = 0.1 * jax.random.normal(k1, (Cmid, Cin, K, K), jnp.float32)
    g1 = 1.0 + 0.1 * jax.random.normal(k2, (Cmid,), jnp.float32)
    b1 = 0.05 * jax.random.normal(k3, (Cmid,), jnp.float32)
    v2 = 0.1 * jax.random.normal(k4, (Cin, Cmid, K, K), jnp.float32)
    g2 = 1.0 + 0.1 * jax.random.normal(k5, (Cin,), jnp.float32)
    b2 = 0.05 * jax.random.normal(k6, (Cin,), jnp.float32)

    w1_oihw = weight_norm(v1, g1)
    w2_oihw = weight_norm(v2, g2)

    x_nchw = jax.random.normal(kx, (N, Cin, H, W), jnp.float32)

    out = wdsr_block(x_nchw, w1_oihw, b1, w2_oihw, b2, res_scale)
    out = jax.block_until_ready(out)

    # XLA references of the same forward pass.
    def conv_nchw(x, w, b, dt):
        y = jax.lax.conv_general_dilated(
            x.astype(dt), w.astype(dt), window_strides=(1, 1), padding="SAME",
            dimension_numbers=("NCHW", "OIHW", "NCHW"),
            preferred_element_type=jnp.float32)
        return y + b.reshape(1, -1, 1, 1)

    def block_ref(dt):
        r = conv_nchw(jax.nn.relu(conv_nchw(x_nchw, w1_oihw, b1, dt)),
                      w2_oihw, b2, dt)
        return r * res_scale + x_nchw

    # Tight check vs. a reference using the same bf16 matmul operands.
    ref_bf16 = block_ref(jnp.bfloat16)
    err_b = float(jnp.max(jnp.abs(out - ref_bf16)))
    assert jnp.allclose(out, ref_bf16, atol=1e-2, rtol=1e-2), err_b

    # Module-fidelity check vs. pure f32 (loosened only for bf16 matmul
    # operand rounding, as anticipated in the review).
    ref_f32 = block_ref(jnp.float32)
    err_f = float(jnp.max(jnp.abs(out - ref_f32)))
    assert jnp.allclose(out, ref_f32, atol=5e-2, rtol=5e-2), err_f

    print("KERNEL_OK")
</pallas_src>

<mosaic_0001>
module attributes {stable_mosaic.version = 11 : i64} {
  func.func @_wdsr_block_kernel(%arg0: i32, %arg1: memref<8x256xf32, #tpu.memory_space<vmem>>, %arg2: memref<8x36xbf16, #tpu.memory_space<vmem>>, %arg3: memref<8x1xf32, #tpu.memory_space<vmem>>, %arg4: memref<4x72xbf16, #tpu.memory_space<vmem>>, %arg5: memref<4x1xf32, #tpu.memory_space<vmem>>, %arg6: memref<8x256xf32, #tpu.memory_space<vmem>>) attributes {dimension_semantics = [#tpu.dimension_semantics<parallel>], iteration_bounds = array<i64: 1>, scalar_prefetch = 0 : i64, scratch_operands = 0 : i64, tpu.core_type = #tpu.core_type<tc>, window_params = [{transform_indices = @transform_0, window_bounds = array<i64: 8, 256>}, {pipeline_mode = #tpu.pipeline_mode<synchronous>, transform_indices = @transform_1, window_bounds = array<i64: 8, 36>}, {pipeline_mode = #tpu.pipeline_mode<synchronous>, transform_indices = @transform_2, window_bounds = array<i64: 8, 1>}, {pipeline_mode = #tpu.pipeline_mode<synchronous>, transform_indices = @transform_3, window_bounds = array<i64: 4, 72>}, {pipeline_mode = #tpu.pipeline_mode<synchronous>, transform_indices = @transform_4, window_bounds = array<i64: 4, 1>}, {transform_indices = @transform_5, window_bounds = array<i64: 8, 256>}]} {
    %0 = tpu.iota {dimensions = array<i32: 1>} : vector<1x256xi32>
    %c16_i32 = arith.constant 16 : i32
    %c0_i32 = arith.constant 0 : i32
    %1 = arith.cmpi eq, %c16_i32, %c0_i32 : i32
    %c1_i32 = arith.constant 1 : i32
    %2 = arith.select %1, %c1_i32, %c16_i32 : i32
    %3 = vector.broadcast %2 : i32 to vector<1x256xi32>
    %4 = arith.remsi %0, %3 : vector<1x256xi32>
    %c0_i32_0 = arith.constant 0 : i32
    %5 = vector.broadcast %c0_i32_0 : i32 to vector<1x256xi32>
    %6 = arith.cmpi ne, %4, %5 : vector<1x256xi32>
    %c0_i32_1 = arith.constant 0 : i32
    %7 = vector.broadcast %c0_i32_1 : i32 to vector<1x256xi32>
    %8 = arith.cmpi slt, %4, %7 : vector<1x256xi32>
    %c0_i32_2 = arith.constant 0 : i32
    %9 = arith.cmpi slt, %2, %c0_i32_2 : i32
    %10 = vector.broadcast %9 : i1 to vector<1x256xi1>
    %11 = vector.broadcast %10 : vector<1x256xi1> to vector<1x256xi1>
    %12 = arith.xori %8, %11 : vector<1x256xi1>
    %13 = arith.andi %12, %6 : vector<1x256xi1>
    %14 = vector.broadcast %2 : i32 to vector<1x256xi32>
    %15 = arith.addi %4, %14 : vector<1x256xi32>
    %16 = arith.select %13, %15, %4 : vector<1x256xi1>, vector<1x256xi32>
    %c1_i32_3 = arith.constant 1 : i32
    %17 = vector.broadcast %c1_i32_3 : i32 to vector<1x256xi32>
    %18 = arith.cmpi sge, %16, %17 : vector<1x256xi32>
    %c17_i32 = arith.constant 17 : i32
    %19 = vector.broadcast %c17_i32 : i32 to vector<1x256xi32>
    %20 = arith.cmpi slt, %16, %19 : vector<1x256xi32>
    %21 = arith.andi %18, %20 : vector<1x256xi1>
    %cst = arith.constant 1.000000e+00 : f32
    %cst_4 = arith.constant 0.000000e+00 : f32
    %22 = vector.broadcast %cst : f32 to vector<1x256xf32>
    %23 = vector.broadcast %cst_4 : f32 to vector<1x256xf32>
    %24 = arith.select %21, %22, %23 : vector<1x256xi1>, vector<1x256xf32>
    %c-1_i32 = arith.constant -1 : i32
    %25 = vector.broadcast %c-1_i32 : i32 to vector<1x256xi32>
    %26 = arith.cmpi sge, %16, %25 : vector<1x256xi32>
    %c15_i32 = arith.constant 15 : i32
    %27 = vector.broadcast %c15_i32 : i32 to vector<1x256xi32>
    %28 = arith.cmpi slt, %16, %27 : vector<1x256xi32>
    %29 = arith.andi %26, %28 : vector<1x256xi1>
    %cst_5 = arith.constant 1.000000e+00 : f32
    %cst_6 = arith.constant 0.000000e+00 : f32
    %30 = vector.broadcast %cst_5 : f32 to vector<1x256xf32>
    %31 = vector.broadcast %cst_6 : f32 to vector<1x256xf32>
    %32 = arith.select %29, %30, %31 : vector<1x256xi1>, vector<1x256xf32>
    %c0 = arith.constant 0 : index
    %c0_7 = arith.constant 0 : index
    %33 = vector.load %arg1[%c0, %c0_7] : memref<8x256xf32, #tpu.memory_space<vmem>>, vector<8x256xf32>
    %34 = vector.extract_strided_slice %33 {offsets = [0, 0], sizes = [4, 256], strides = [1, 1]} : vector<8x256xf32> to vector<4x256xf32>
    %35 = vector.extract_strided_slice %33 {offsets = [4, 0], sizes = [4, 256], strides = [1, 1]} : vector<8x256xf32> to vector<4x256xf32>
    %c0_8 = arith.constant 0 : index
    %c0_9 = arith.constant 0 : index
    %36 = vector.load %arg2[%c0_8, %c0_9] : memref<8x36xbf16, #tpu.memory_space<vmem>>, vector<8x36xbf16>
    %37 = vector.shape_cast %24 : vector<1x256xf32> to vector<1x256xf32>
    %38 = vector.broadcast %37 : vector<1x256xf32> to vector<4x256xf32>
    %39 = vector.shape_cast %32 : vector<1x256xf32> to vector<1x256xf32>
    %40 = vector.broadcast %39 : vector<1x256xf32> to vector<4x256xf32>
    %cst_10 = arith.constant 0.000000e+00 : f32
    %41 = vector.broadcast %cst_10 : f32 to vector<4x128xf32>
    %42 = tpu.concatenate %41, %34, %41 in 1 : vector<4x128xf32>, vector<4x256xf32>, vector<4x128xf32> -> vector<4x512xf32>
    %43 = tpu.concatenate %41, %35, %41 in 1 : vector<4x128xf32>, vector<4x256xf32>, vector<4x128xf32> -> vector<4x512xf32>
    %44 = vector.extract_strided_slice %42 {offsets = [0, 111], sizes = [4, 256], strides = [1, 1]} : vector<4x512xf32> to vector<4x256xf32>
    %45 = arith.mulf %44, %38 : vector<4x256xf32>
    %46 = vector.extract_strided_slice %43 {offsets = [0, 111], sizes = [4, 256], strides = [1, 1]} : vector<4x512xf32> to vector<4x256xf32>
    %47 = arith.mulf %46, %38 : vector<4x256xf32>
    %48 = tpu.concatenate %45, %47 in 1 : vector<4x256xf32>, vector<4x256xf32> -> vector<4x512xf32>
    %49 = vector.extract_strided_slice %42 {offsets = [0, 112], sizes = [4, 256], strides = [1, 1]} : vector<4x512xf32> to vector<4x256xf32>
    %50 = vector.extract_strided_slice %43 {offsets = [0, 112], sizes = [4, 256], strides = [1, 1]} : vector<4x512xf32> to vector<4x256xf32>
    %51 = tpu.concatenate %49, %50 in 1 : vector<4x256xf32>, vector<4x256xf32> -> vector<4x512xf32>
    %52 = vector.extract_strided_slice %42 {offsets = [0, 113], sizes = [4, 256], strides = [1, 1]} : vector<4x512xf32> to vector<4x256xf32>
    %53 = arith.mulf %52, %40 : vector<4x256xf32>
    %54 = vector.extract_strided_slice %43 {offsets = [0, 113], sizes = [4, 256], strides = [1, 1]} : vector<4x512xf32> to vector<4x256xf32>
    %55 = arith.mulf %54, %40 : vector<4x256xf32>
    %56 = tpu.concatenate %53, %55 in 1 : vector<4x256xf32>, vector<4x256xf32> -> vector<4x512xf32>
    %57 = vector.extract_strided_slice %42 {offsets = [0, 127], sizes = [4, 256], strides = [1, 1]} : vector<4x512xf32> to vector<4x256xf32>
    %58 = arith.mulf %57, %38 : vector<4x256xf32>
    %59 = vector.extract_strided_slice %43 {offsets = [0, 127], sizes = [4, 256], strides = [1, 1]} : vector<4x512xf32> to vector<4x256xf32>
    %60 = arith.mulf %59, %38 : vector<4x256xf32>
    %61 = tpu.concatenate %58, %60 in 1 : vector<4x256xf32>, vector<4x256xf32> -> vector<4x512xf32>
    %62 = vector.extract_strided_slice %42 {offsets = [0, 128], sizes = [4, 256], strides = [1, 1]} : vector<4x512xf32> to vector<4x256xf32>
    %63 = vector.extract_strided_slice %43 {offsets = [0, 128], sizes = [4, 256], strides = [1, 1]} : vector<4x512xf32> to vector<4x256xf32>
    %64 = tpu.concatenate %62, %63 in 1 : vector<4x256xf32>, vector<4x256xf32> -> vector<4x512xf32>
    %65 = vector.extract_strided_slice %42 {offsets = [0, 129], sizes = [4, 256], strides = [1, 1]} : vector<4x512xf32> to vector<4x256xf32>
    %66 = arith.mulf %65, %40 : vector<4x256xf32>
    %67 = vector.extract_strided_slice %43 {offsets = [0, 129], sizes = [4, 256], strides = [1, 1]} : vector<4x512xf32> to vector<4x256xf32>
    %68 = arith.mulf %67, %40 : vector<4x256xf32>
    %69 = tpu.concatenate %66, %68 in 1 : vector<4x256xf32>, vector<4x256xf32> -> vector<4x512xf32>
    %70 = vector.extract_strided_slice %42 {offsets = [0, 143], sizes = [4, 256], strides = [1, 1]} : vector<4x512xf32> to vector<4x256xf32>
    %71 = arith.mulf %70, %38 : vector<4x256xf32>
    %72 = vector.extract_strided_slice %43 {offsets = [0, 143], sizes = [4, 256], strides = [1, 1]} : vector<4x512xf32> to vector<4x256xf32>
    %73 = arith.mulf %72, %38 : vector<4x256xf32>
    %74 = tpu.concatenate %71, %73 in 1 : vector<4x256xf32>, vector<4x256xf32> -> vector<4x512xf32>
    %75 = vector.extract_strided_slice %42 {offsets = [0, 144], sizes = [4, 256], strides = [1, 1]} : vector<4x512xf32> to vector<4x256xf32>
    %76 = vector.extract_strided_slice %43 {offsets = [0, 144], sizes = [4, 256], strides = [1, 1]} : vector<4x512xf32> to vector<4x256xf32>
    %77 = tpu.concatenate %75, %76 in 1 : vector<4x256xf32>, vector<4x256xf32> -> vector<4x512xf32>
    %78 = vector.extract_strided_slice %42 {offsets = [0, 145], sizes = [4, 256], strides = [1, 1]} : vector<4x512xf32> to vector<4x256xf32>
    %79 = arith.mulf %78, %40 : vector<4x256xf32>
    %80 = vector.extract_strided_slice %43 {offsets = [0, 145], sizes = [4, 256], strides = [1, 1]} : vector<4x512xf32> to vector<4x256xf32>
    %81 = arith.mulf %80, %40 : vector<4x256xf32>
    %82 = tpu.concatenate %79, %81 in 1 : vector<4x256xf32>, vector<4x256xf32> -> vector<4x512xf32>
    %83 = tpu.concatenate %48, %51, %56, %61, %64, %69, %74, %77, %82 in 0 : vector<4x512xf32>, vector<4x512xf32>, vector<4x512xf32>, vector<4x512xf32>, vector<4x512xf32>, vector<4x512xf32>, vector<4x512xf32>, vector<4x512xf32>, vector<4x512xf32> -> vector<36x512xf32>
    %84 = arith.truncf %83 : vector<36x512xf32> to vector<36x512xbf16>
    %cst_11 = arith.constant dense<0.000000e+00> : vector<8x512xf32>
    %85 = tpu.matmul %36, %84, %cst_11 {dimension_numbers = #tpu.dot_dimension_numbers<[1], [0], [0], [1], [0, 0, 1, 1], [], []>} : vector<8x36xbf16>, vector<36x512xbf16>, vector<8x512xf32> -> vector<8x512xf32>
    %c0_12 = arith.constant 0 : index
    %c0_13 = arith.constant 0 : index
    %86 = vector.load %arg3[%c0_12, %c0_13] : memref<8x1xf32, #tpu.memory_space<vmem>>, vector<8x1xf32>
    %87 = vector.broadcast %86 : vector<8x1xf32> to vector<8x512xf32>
    %88 = arith.addf %85, %87 : vector<8x512xf32>
    %cst_14 = arith.constant 0.000000e+00 : f32
    %89 = vector.broadcast %cst_14 : f32 to vector<8x512xf32>
    %90 = arith.maximumf %88, %89 : vector<8x512xf32>
    %91 = vector.extract_strided_slice %90 {offsets = [0, 0], sizes = [8, 256], strides = [1, 1]} : vector<8x512xf32> to vector<8x256xf32>
    %92 = vector.extract_strided_slice %90 {offsets = [0, 256], sizes = [8, 256], strides = [1, 1]} : vector<8x512xf32> to vector<8x256xf32>
    %c0_15 = arith.constant 0 : index
    %c0_16 = arith.constant 0 : index
    %93 = vector.load %arg4[%c0_15, %c0_16] : memref<4x72xbf16, #tpu.memory_space<vmem>>, vector<4x72xbf16>
    %94 = vector.shape_cast %24 : vector<1x256xf32> to vector<1x256xf32>
    %95 = vector.broadcast %94 : vector<1x256xf32> to vector<8x256xf32>
    %96 = vector.shape_cast %32 : vector<1x256xf32> to vector<1x256xf32>
    %97 = vector.broadcast %96 : vector<1x256xf32> to vector<8x256xf32>
    %cst_17 = arith.constant 0.000000e+00 : f32
    %98 = vector.broadcast %cst_17 : f32 to vector<8x128xf32>
    %99 = tpu.concatenate %98, %91, %98 in 1 : vector<8x128xf32>, vector<8x256xf32>, vector<8x128xf32> -> vector<8x512xf32>
    %100 = tpu.concatenate %98, %92, %98 in 1 : vector<8x128xf32>, vector<8x256xf32>, vector<8x128xf32> -> vector<8x512xf32>
    %101 = vector.extract_strided_slice %99 {offsets = [0, 111], sizes = [8, 256], strides = [1, 1]} : vector<8x512xf32> to vector<8x256xf32>
    %102 = arith.mulf %101, %95 : vector<8x256xf32>
    %103 = vector.extract_strided_slice %100 {offsets = [0, 111], sizes = [8, 256], strides = [1, 1]} : vector<8x512xf32> to vector<8x256xf32>
    %104 = arith.mulf %103, %95 : vector<8x256xf32>
    %105 = tpu.concatenate %102, %104 in 1 : vector<8x256xf32>, vector<8x256xf32> -> vector<8x512xf32>
    %106 = vector.extract_strided_slice %99 {offsets = [0, 112], sizes = [8, 256], strides = [1, 1]} : vector<8x512xf32> to vector<8x256xf32>
    %107 = vector.extract_strided_slice %100 {offsets = [0, 112], sizes = [8, 256], strides = [1, 1]} : vector<8x512xf32> to vector<8x256xf32>
    %108 = tpu.concatenate %106, %107 in 1 : vector<8x256xf32>, vector<8x256xf32> -> vector<8x512xf32>
    %109 = vector.extract_strided_slice %99 {offsets = [0, 113], sizes = [8, 256], strides = [1, 1]} : vector<8x512xf32> to vector<8x256xf32>
    %110 = arith.mulf %109, %97 : vector<8x256xf32>
    %111 = vector.extract_strided_slice %100 {offsets = [0, 113], sizes = [8, 256], strides = [1, 1]} : vector<8x512xf32> to vector<8x256xf32>
    %112 = arith.mulf %111, %97 : vector<8x256xf32>
    %113 = tpu.concatenate %110, %112 in 1 : vector<8x256xf32>, vector<8x256xf32> -> vector<8x512xf32>
    %114 = vector.extract_strided_slice %99 {offsets = [0, 127], sizes = [8, 256], strides = [1, 1]} : vector<8x512xf32> to vector<8x256xf32>
    %115 = arith.mulf %114, %95 : vector<8x256xf32>
    %116 = vector.extract_strided_slice %100 {offsets = [0, 127], sizes = [8, 256], strides = [1, 1]} : vector<8x512xf32> to vector<8x256xf32>
    %117 = arith.mulf %116, %95 : vector<8x256xf32>
    %118 = tpu.concatenate %115, %117 in 1 : vector<8x256xf32>, vector<8x256xf32> -> vector<8x512xf32>
    %119 = vector.extract_strided_slice %99 {offsets = [0, 128], sizes = [8, 256], strides = [1, 1]} : vector<8x512xf32> to vector<8x256xf32>
    %120 = vector.extract_strided_slice %100 {offsets = [0, 128], sizes = [8, 256], strides = [1, 1]} : vector<8x512xf32> to vector<8x256xf32>
    %121 = tpu.concatenate %119, %120 in 1 : vector<8x256xf32>, vector<8x256xf32> -> vector<8x512xf32>
    %122 = vector.extract_strided_slice %99 {offsets = [0, 129], sizes = [8, 256], strides = [1, 1]} : vector<8x512xf32> to vector<8x256xf32>
    %123 = arith.mulf %122, %97 : vector<8x256xf32>
    %124 = vector.extract_strided_slice %100 {offsets = [0, 129], sizes = [8, 256], strides = [1, 1]} : vector<8x512xf32> to vector<8x256xf32>
    %125 = arith.mulf %124, %97 : vector<8x256xf32>
    %126 = tpu.concatenate %123, %125 in 1 : vector<8x256xf32>, vector<8x256xf32> -> vector<8x512xf32>
    %127 = vector.extract_strided_slice %99 {offsets = [0, 143], sizes = [8, 256], strides = [1, 1]} : vector<8x512xf32> to vector<8x256xf32>
    %128 = arith.mulf %127, %95 : vector<8x256xf32>
    %129 = vector.extract_strided_slice %100 {offsets = [0, 143], sizes = [8, 256], strides = [1, 1]} : vector<8x512xf32> to vector<8x256xf32>
    %130 = arith.mulf %129, %95 : vector<8x256xf32>
    %131 = tpu.concatenate %128, %130 in 1 : vector<8x256xf32>, vector<8x256xf32> -> vector<8x512xf32>
    %132 = vector.extract_strided_slice %99 {offsets = [0, 144], sizes = [8, 256], strides = [1, 1]} : vector<8x512xf32> to vector<8x256xf32>
    %133 = vector.extract_strided_slice %100 {offsets = [0, 144], sizes = [8, 256], strides = [1, 1]} : vector<8x512xf32> to vector<8x256xf32>
    %134 = tpu.concatenate %132, %133 in 1 : vector<8x256xf32>, vector<8x256xf32> -> vector<8x512xf32>
    %135 = vector.extract_strided_slice %99 {offsets = [0, 145], sizes = [8, 256], strides = [1, 1]} : vector<8x512xf32> to vector<8x256xf32>
    %136 = arith.mulf %135, %97 : vector<8x256xf32>
    %137 = vector.extract_strided_slice %100 {offsets = [0, 145], sizes = [8, 256], strides = [1, 1]} : vector<8x512xf32> to vector<8x256xf32>
    %138 = arith.mulf %137, %97 : vector<8x256xf32>
    %139 = tpu.concatenate %136, %138 in 1 : vector<8x256xf32>, vector<8x256xf32> -> vector<8x512xf32>
    %140 = tpu.concatenate %105, %108, %113, %118, %121, %126, %131, %134, %139 in 0 : vector<8x512xf32>, vector<8x512xf32>, vector<8x512xf32>, vector<8x512xf32>, vector<8x512xf32>, vector<8x512xf32>, vector<8x512xf32>, vector<8x512xf32>, vector<8x512xf32> -> vector<72x512xf32>
    %141 = arith.truncf %140 : vector<72x512xf32> to vector<72x512xbf16>
    %cst_18 = arith.constant dense<0.000000e+00> : vector<4x512xf32>
    %142 = tpu.matmul %93, %141, %cst_18 {dimension_numbers = #tpu.dot_dimension_numbers<[1], [0], [0], [1], [0, 0, 1, 1], [], []>} : vector<4x72xbf16>, vector<72x512xbf16>, vector<4x512xf32> -> vector<4x512xf32>
    %c0_19 = arith.constant 0 : index
    %c0_20 = arith.constant 0 : index
    %143 = vector.load %arg5[%c0_19, %c0_20] : memref<4x1xf32, #tpu.memory_space<vmem>>, vector<4x1xf32>
    %144 = vector.broadcast %143 : vector<4x1xf32> to vector<4x512xf32>
    %145 = arith.addf %142, %144 : vector<4x512xf32>
    %146 = vector.extract_strided_slice %145 {offsets = [0, 0], sizes = [4, 256], strides = [1, 1]} : vector<4x512xf32> to vector<4x256xf32>
    %cst_21 = arith.constant 1.000000e+00 : f32
    %147 = vector.broadcast %cst_21 : f32 to vector<4x256xf32>
    %148 = arith.mulf %146, %147 : vector<4x256xf32>
    %149 = arith.addf %148, %34 : vector<4x256xf32>
    %150 = vector.extract_strided_slice %145 {offsets = [0, 256], sizes = [4, 256], strides = [1, 1]} : vector<4x512xf32> to vector<4x256xf32>
    %cst_22 = arith.constant 1.000000e+00 : f32
    %151 = vector.broadcast %cst_22 : f32 to vector<4x256xf32>
    %152 = arith.mulf %150, %151 : vector<4x256xf32>
    %153 = arith.addf %152, %35 : vector<4x256xf32>
    %154 = tpu.concatenate %149, %153 in 0 : vector<4x256xf32>, vector<4x256xf32> -> vector<8x256xf32>
    %c0_23 = arith.constant 0 : index
    %c0_24 = arith.constant 0 : index
    %155 = vector.load %arg6[%c0_23, %c0_24] : memref<8x256xf32, #tpu.memory_space<vmem>>, vector<8x256xf32>
    tpu.vector_store %arg6[%c0_23, %c0_24], %154 {strides = array<i32>} : memref<8x256xf32, #tpu.memory_space<vmem>>, vector<8x256xf32>,
    return
  }
  func.func @transform_0(%arg0: i32) -> (i32, i32) {
    %c0_i32 = arith.constant 0 : i32
    %c0_i32_0 = arith.constant 0 : i32
    return %arg0, %c0_i32 : i32, i32
  }
  func.func @transform_1(%arg0: i32) -> (i32, i32) {
    %c0_i32 = arith.constant 0 : i32
    %c0_i32_0 = arith.constant 0 : i32
    %c0_i32_1 = arith.constant 0 : i32
    return %c0_i32, %c0_i32_0 : i32, i32
  }
  func.func @transform_2(%arg0: i32) -> (i32, i32) {
    %c0_i32 = arith.constant 0 : i32
    %c0_i32_0 = arith.constant 0 : i32
    %c0_i32_1 = arith.constant 0 : i32
    return %c0_i32, %c0_i32_0 : i32, i32
  }
  func.func @transform_3(%arg0: i32) -> (i32, i32) {
    %c0_i32 = arith.constant 0 : i32
    %c0_i32_0 = arith.constant 0 : i32
    %c0_i32_1 = arith.constant 0 : i32
    return %c0_i32, %c0_i32_0 : i32, i32
  }
  func.func @transform_4(%arg0: i32) -> (i32, i32) {
    %c0_i32 = arith.constant 0 : i32
    %c0_i32_0 = arith.constant 0 : i32
    %c0_i32_1 = arith.constant 0 : i32
    return %c0_i32, %c0_i32_0 : i32, i32
  }
  func.func @transform_5(%arg0: i32) -> (i32, i32) {
    %c0_i32 = arith.constant 0 : i32
    %c0_i32_0 = arith.constant 0 : i32
    return %arg0, %c0_i32 : i32, i32
  }
}

</mosaic_0001>

<llo_original>
// kernel: tpu_custom_call.1
$region0: #{tpu_custom_call.1}
  #allocation0 [shape = 'u32[]', space=smem, size = 0x4, offset = 0x4, fixed_abs, tag = 'smem constant byte address 0x4 - core index']
  #allocation1 [shape = 'u32[144,128]{1,0:T(1,128)}', space=vmem, size = 0x12000, scoped, tag = 'internal scratch']
  %s0 = inlined_call_operand.hbm [shape: f32[8,256], index: 0, kind: input, shape index: {}]
  %s1 = inlined_call_operand.vmem [shape: bf16[8,36], index: 1, kind: input, shape index: {}]
  %s2 = inlined_call_operand.vmem [shape: f32[8,1], index: 2, kind: input, shape index: {}]
  %s3 = inlined_call_operand.vmem [shape: bf16[4,72], index: 3, kind: input, shape index: {}]
  %s4 = inlined_call_operand.vmem [shape: f32[4,1], index: 4, kind: input, shape index: {}]
  %s5 = inlined_call_operand.hbm [shape: f32[8,256], index: 5, kind: output, shape index: {}]
  %s6 = sld [smem:[#allocation0]]
  $region34: #{tpu_custom_call.1} parent=0
    _
  %s8 = ssub.s32 1, %s6
  %s9 = scalar_select 0, %s8, %s6
  $region1: #{tpu_custom_call.1} parent=0
    #allocation2 [shape = 'u8[8192]{0}', space=vmem, size = 0x2000, scoped, tag = 'input window, operand 0, single buffered']
    #allocation3 [shape = 's32[1]{0}', space=sflag, size = 0x4, scoped, tag = 'scoped memory for tpu_custom_call.1']
    #allocation4 [shape = 's32[1]{0}', space=sflag, size = 0x4, scoped, tag = 'scoped memory for tpu_custom_call.1']
    #allocation5 [shape = 'u8[8192]{0}', space=vmem, size = 0x2000, scoped, tag = 'output window, operand 0, single buffered']
    %10 = vsyncpa [#allocation3], 0
    %11 = vsyncpa [#allocation4], 0
    // Predicated region
    $region2: #{tpu_custom_call.1} parent=1 // pred_check
      _
    $region3: #{tpu_custom_call.1} parent=1 // pred_check_branch
      %13 = sbr.rel (0) target = $region5
    $region4: #{tpu_custom_call.1} parent=1 // pred_region
      %s15 = ssub.s32 256, 256
      %16 = vsyncadd [#allocation3], %s15
      %s18 = sshll.u32 [#allocation2], 4
      %s19 = int_to_ptr.vmem [resolvable:$true] %s18
      %21 = dma.hbm_to_vmem [thread:$0]  %s0, 256, %s19, [#allocation3]
    $region5: #{tpu_custom_call.1} parent=1 // pred_fallthru
      _
    // Predicated region
    $region6: #{tpu_custom_call.1} parent=1 // pred_check
      _
    $region7: #{tpu_custom_call.1} parent=1 // pred_check_branch
      %23 = sbr.rel (0) target = $region9
    $region8: #{tpu_custom_call.1} parent=1 // pred_region
      _
    $region9: #{tpu_custom_call.1} parent=1 // pred_fallthru
      _
    // Predicated region
    $region10: #{tpu_custom_call.1} parent=1 // pred_check
      _
    $region11: #{tpu_custom_call.1} parent=1 // pred_check_branch
      %25 = sbr.rel (0) target = $region13
    $region12: #{tpu_custom_call.1} parent=1 // pred_region
      _
    $region13: #{tpu_custom_call.1} parent=1 // pred_fallthru
      _
    // Predicated region
    $region14: #{tpu_custom_call.1} parent=1 // pred_check
      _
    $region15: #{tpu_custom_call.1} parent=1 // pred_check_branch
      %27 = sbr.rel (0) target = $region17
    $region16: #{tpu_custom_call.1} parent=1 // pred_region
      _
    $region17: #{tpu_custom_call.1} parent=1 // pred_fallthru
      _
    // Predicated region
    $region18: #{tpu_custom_call.1} parent=1 // pred_check
      _
    $region19: #{tpu_custom_call.1} parent=1 // pred_check_branch
      %29 = sbr.rel (0) target = $region21
    $region20: #{tpu_custom_call.1} parent=1 // pred_region
      _
    $region21: #{tpu_custom_call.1} parent=1 // pred_fallthru
      _
    // Predicated region
    $region22: #{tpu_custom_call.1} parent=1 // pred_check
      _
    $region23: #{tpu_custom_call.1} parent=1 // pred_check_branch
      %31 = sbr.rel (0) target = $region25
    $region24: #{tpu_custom_call.1} parent=1 // pred_region
      %32 = dma.done [#allocation3], 256
    $region25: #{tpu_custom_call.1} parent=1 // pred_fallthru
      _
    %v34 = vlaneseq
    %v35 = vand.u32 %v34, 127
    %v36 = vadd.s32 %v35, 128
    %vm37 = vcmp.lt.s32.totalorder %v35, 0
    %v38 = vsub.s32 0, %v35
    %v39 = vsel %vm37, %v38, %v35
    %v40 = vshrl.u32 %v39, 4
    %v41 = vand.u32 %v39, 15
    %v42 = vsub.s32 0, %v41
    %v43 = vsel %vm37, %v42, %v41
    %vm44 = vcmp.lt.s32.totalorder %v36, 0
    %v45 = vsub.s32 0, %v36
    %v46 = vsel %vm44, %v45, %v36
    %v47 = vshrl.u32 %v46, 4
    %v48 = vand.u32 %v46, 15
    %v49 = vsub.s32 0, %v48
    %v50 = vsel %vm44, %v49, %v48
    %vm51 = vcmp.ne.s32.totalorder %v43, 0
    %vm52 = vcmp.ne.s32.totalorder %v50, 0
    %vm53 = vcmp.lt.s32.totalorder %v43, 0
    %vm54 = vcmp.lt.s32.totalorder %v50, 0
    %vm55 = vmand %vm53, %vm51
    %vm56 = vmand %vm54, %vm52
    %v57 = vadd.s32 %v43, 16
    %v58 = vadd.s32 %v50, 16
    %v59 = vsel %vm55, %v57, %v43
    %v60 = vsel %vm56, %v58, %v50
    %vm61 = vcmp.ge.s32.totalorder %v59, 1
    %vm62 = vcmp.ge.s32.totalorder %v60, 1
    %vm63 = vcmp.lt.s32.totalorder %v59, 17
    %vm64 = vcmp.lt.s32.totalorder %v60, 17
    %vm65 = vmand %vm61, %vm63
    %vm66 = vmand %vm62, %vm64
    %v67 = vsel %vm65, 1.0, 0.0
    %v68 = vsel %vm66, 1.0, 0.0
    %vm69 = vcmp.ge.s32.totalorder %v59, 4294967295
    %vm70 = vcmp.ge.s32.totalorder %v60, 4294967295
    %vm71 = vcmp.lt.s32.totalorder %v59, 15
    %vm72 = vcmp.lt.s32.totalorder %v60, 15
    %vm73 = vmand %vm69, %vm71
    %vm74 = vmand %vm70, %vm72
    %v75 = vsel %vm73, 1.0, 0.0
    %v76 = vsel %vm74, 1.0, 0.0
    %v77 = vld [vmem:[#allocation2] sm:$0xff]
    %v78 = vld [vmem:[#allocation2 + $0x8] sm:$0xff]
    %v79 = vld [vmem:[%s1] sm:$0xf]
    %v82 = vrot.slane %v77, 4
    %v83 = vrot.slane %v78, 4
    %88 = vrot.lane.b32.xlu0 %v67, 111
    %v89 = vpop.permute.xlu0 %88
    %90 = vrot.lane.b32.xlu0 %v68, 111
    %v91 = vpop.permute.xlu0 %90
    %vm92 = vcmask 908288
    %v93 = vsel %vm92, %v89, %v91
    %v97 = vmul.f32 %v89, 0.0
    %v98 = vmul.f32 %v77, %v93
    %v99 = vmul.f32 %v78, %v91
    %v100 = vmul.f32 %v82, %v93
    %v101 = vmul.f32 %v83, %v91
    %105 = vrot.lane.b32.xlu0 %v97, 17
    %v106 = vpop.permute.xlu0 %105
    %107 = vrot.lane.b32.xlu0 %v98, 17
    %v108 = vpop.permute.xlu0 %107
    %109 = vrot.lane.b32.xlu0 %v99, 17
    %v110 = vpop.permute.xlu0 %109
    %vm111 = vcmask 138240
    %v112 = vsel %vm111, %v106, %v108
    %v113 = vsel %vm111, %v108, %v110
    %118 = vrot.lane.b32.xlu0 %v100, 17
    %v119 = vpop.permute.xlu0 %118
    %120 = vrot.lane.b32.xlu0 %v101, 17
    %v121 = vpop.permute.xlu0 %120
    %v122 = vsel %vm111, %v106, %v119
    %v123 = vsel %vm111, %v119, %v121
    %127 = vrot.lane.b32.xlu0 0.0, 16
    %v128 = vpop.permute.xlu0 %127
    %129 = vrot.lane.b32.xlu0 %v77, 16
    %v130 = vpop.permute.xlu0 %129
    %131 = vrot.lane.b32.xlu0 %v78, 16
    %v132 = vpop.permute.xlu0 %131
    %vm133 = vcmask 130048
    %v134 = vsel %vm133, %v128, %v130
    %v135 = vsel %vm133, %v130, %v132
    %136 = vrot.lane.b32.xlu0 %v82, 16
    %v137 = vpop.permute.xlu0 %136
    %138 = vrot.lane.b32.xlu0 %v83, 16
    %v139 = vpop.permute.xlu0 %138
    %v140 = vsel %vm133, %v128, %v137
    %v141 = vsel %vm133, %v137, %v139
    %144 = vrot.lane.b32.xlu0 %v75, 113
    %v145 = vpop.permute.xlu0 %144
    %146 = vrot.lane.b32.xlu0 %v76, 113
    %v147 = vpop.permute.xlu0 %146
    %vm148 = vcmask 924672
    %v149 = vsel %vm148, %v145, %v147
    %v153 = vmul.f32 %v145, 0.0
    %v154 = vmul.f32 %v77, %v149
    %v155 = vmul.f32 %v78, %v147
    %v156 = vmul.f32 %v82, %v149
    %v157 = vmul.f32 %v83, %v147
    %161 = vrot.lane.b32.xlu0 %v153, 15
    %v162 = vpop.permute.xlu0 %161
    %163 = vrot.lane.b32.xlu0 %v154, 15
    %v164 = vpop.permute.xlu0 %163
    %165 = vrot.lane.b32.xlu0 %v155, 15
    %v166 = vpop.permute.xlu0 %165
    %vm167 = vcmask 121856
    %v168 = vsel %vm167, %v162, %v164
    %v169 = vsel %vm167, %v164, %v166
    %174 = vrot.lane.b32.xlu0 %v156, 15
    %v175 = vpop.permute.xlu0 %174
    %176 = vrot.lane.b32.xlu0 %v157, 15
    %v177 = vpop.permute.xlu0 %176
    %v178 = vsel %vm167, %v162, %v175
    %v179 = vsel %vm167, %v175, %v177
    %182 = vrot.lane.b32.xlu0 %v67, 127
    %v183 = vpop.permute.xlu0 %182
    %184 = vrot.lane.b32.xlu0 %v68, 127
    %v185 = vpop.permute.xlu0 %184
    %vm186 = vcmask 1039360
    %v187 = vsel %vm186, %v183, %v185
    %v191 = vmul.f32 %v183, 0.0
    %v192 = vmul.f32 %v77, %v187
    %v193 = vmul.f32 %v78, %v185
    %v194 = vmul.f32 %v82, %v187
    %v195 = vmul.f32 %v83, %v185
    %199 = vrot.lane.b32.xlu0 %v191, 1
    %v200 = vpop.permute.xlu0 %199
    %201 = vrot.lane.b32.xlu0 %v192, 1
    %v202 = vpop.permute.xlu0 %201
    %203 = vrot.lane.b32.xlu0 %v193, 1
    %v204 = vpop.permute.xlu0 %203
    %vm205 = vcmask 7168
    %v206 = vsel %vm205, %v200, %v202
    %v207 = vsel %vm205, %v202, %v204
    %210 = vrot.lane.b32.xlu0 %v194, 1
    %v211 = vpop.permute.xlu0 %210
    %212 = vrot.lane.b32.xlu0 %v195, 1
    %v213 = vpop.permute.xlu0 %212
    %v214 = vsel %vm205, %v200, %v211
    %v215 = vsel %vm205, %v211, %v213
    %216 = vrot.lane.b32.xlu0 %v75, 1
    %v217 = vpop.permute.xlu0 %216
    %218 = vrot.lane.b32.xlu0 %v76, 1
    %v219 = vpop.permute.xlu0 %218
    %v220 = vsel %vm205, %v217, %v219
    %v224 = vmul.f32 %v77, %v217
    %v225 = vmul.f32 %v78, %v220
    %v226 = vmul.f32 %v219, 0.0
    %v227 = vmul.f32 %v82, %v217
    %v228 = vmul.f32 %v83, %v220
    %232 = vrot.lane.b32.xlu0 %v224, 127
    %v233 = vpop.permute.xlu0 %232
    %234 = vrot.lane.b32.xlu0 %v225, 127
    %v235 = vpop.permute.xlu0 %234
    %236 = vrot.lane.b32.xlu0 %v226, 127
    %v237 = vpop.permute.xlu0 %236
    %v238 = vsel %vm186, %v233, %v235
    %v239 = vsel %vm186, %v235, %v237
    %242 = vrot.lane.b32.xlu0 %v227, 127
    %v243 = vpop.permute.xlu0 %242
    %244 = vrot.lane.b32.xlu0 %v228, 127
    %v245 = vpop.permute.xlu0 %244
    %v246 = vsel %vm186, %v243, %v245
    %v247 = vsel %vm186, %v245, %v237
    %248 = vrot.lane.b32.xlu0 %v67, 15
    %v249 = vpop.permute.xlu0 %248
    %250 = vrot.lane.b32.xlu0 %v68, 15
    %v251 = vpop.permute.xlu0 %250
    %v252 = vsel %vm167, %v249, %v251
    %v256 = vmul.f32 %v77, %v249
    %v257 = vmul.f32 %v78, %v252
    %v258 = vmul.f32 %v251, 0.0
    %v259 = vmul.f32 %v82, %v249
    %v260 = vmul.f32 %v83, %v252
    %264 = vrot.lane.b32.xlu0 %v256, 113
    %v265 = vpop.permute.xlu0 %264
    %266 = vrot.lane.b32.xlu0 %v257, 113
    %v267 = vpop.permute.xlu0 %266
    %268 = vrot.lane.b32.xlu0 %v258, 113
    %v269 = vpop.permute.xlu0 %268
    %v270 = vsel %vm148, %v265, %v267
    %v271 = vsel %vm148, %v267, %v269
    %276 = vrot.lane.b32.xlu0 %v259, 113
    %v277 = vpop.permute.xlu0 %276
    %278 = vrot.lane.b32.xlu0 %v260, 113
    %v279 = vpop.permute.xlu0 %278
    %v280 = vsel %vm148, %v277, %v279
    %v281 = vsel %vm148, %v279, %v269
    %284 = vrot.lane.b32.xlu0 %v77, 112
    %v285 = vpop.permute.xlu0 %284
    %286 = vrot.lane.b32.xlu0 %v78, 112
    %v287 = vpop.permute.xlu0 %286
    %288 = vrot.lane.b32.xlu0 0.0, 112
    %v289 = vpop.permute.xlu0 %288
    %vm290 = vcmask 916480
    %v291 = vsel %vm290, %v285, %v287
    %v292 = vsel %vm290, %v287, %v289
    %293 = vrot.lane.b32.xlu0 %v82, 112
    %v294 = vpop.permute.xlu0 %293
    %295 = vrot.lane.b32.xlu0 %v83, 112
    %v296 = vpop.permute.xlu0 %295
    %v297 = vsel %vm290, %v294, %v296
    %v298 = vsel %vm290, %v296, %v289
    %299 = vrot.lane.b32.xlu0 %v75, 17
    %v300 = vpop.permute.xlu0 %299
    %301 = vrot.lane.b32.xlu0 %v76, 17
    %v302 = vpop.permute.xlu0 %301
    %v303 = vsel %vm111, %v300, %v302
    %v307 = vmul.f32 %v77, %v300
    %v308 = vmul.f32 %v78, %v303
    %v309 = vmul.f32 %v302, 0.0
    %v310 = vmul.f32 %v82, %v300
    %v311 = vmul.f32 %v83, %v303
    %315 = vrot.lane.b32.xlu0 %v307, 111
    %v316 = vpop.permute.xlu0 %315
    %317 = vrot.lane.b32.xlu0 %v308, 111
    %v318 = vpop.permute.xlu0 %317
    %319 = vrot.lane.b32.xlu0 %v309, 111
    %v320 = vpop.permute.xlu0 %319
    %v321 = vsel %vm92, %v316, %v318
    %v322 = vsel %vm92, %v318, %v320
    %327 = vrot.lane.b32.xlu0 %v310, 111
    %v328 = vpop.permute.xlu0 %327
    %329 = vrot.lane.b32.xlu0 %v311, 111
    %v330 = vpop.permute.xlu0 %329
    %v331 = vsel %vm92, %v328, %v330
    %v332 = vsel %vm92, %v330, %v320
    %v335 = vrot.slane %v134, 4
    %v336 = vrot.slane %v135, 4
    %v337 = vrot.slane %v140, 4
    %v338 = vrot.slane %v141, 4
    %v343 = vrot.slane %v206, 4
    %v344 = vrot.slane %v207, 4
    %v345 = vrot.slane %v214, 4
    %v346 = vrot.slane %v215, 4
    %v351 = vrot.slane %v238, 4
    %v352 = vrot.slane %v239, 4
    %v353 = vrot.slane %v246, 4
    %v354 = vrot.slane %v247, 4
    %v359 = vrot.slane %v291, 4
    %v360 = vrot.slane %v292, 4
    %v361 = vrot.slane %v297, 4
    %v362 = vrot.slane %v298, 4
    %vm367 = vcmask 1043456
    %v368 = vsel %vm367, %v112, %v335
    %v369 = vsel %vm367, %v113, %v336
    %v370 = vsel %vm367, %v122, %v337
    %v371 = vsel %vm367, %v123, %v338
    %v372 = vsel %vm367, %v168, %v343
    %v373 = vsel %vm367, %v169, %v344
    %v374 = vsel %vm367, %v178, %v345
    %v375 = vsel %vm367, %v179, %v346
    %v376 = vsel %vm367, %v77, %v351
    %v377 = vsel %vm367, %v78, %v352
    %v378 = vsel %vm367, %v82, %v353
    %v379 = vsel %vm367, %v83, %v354
    %v380 = vsel %vm367, %v270, %v359
    %v381 = vsel %vm367, %v271, %v360
    %v382 = vsel %vm367, %v280, %v361
    %v383 = vsel %vm367, %v281, %v362
    %v384 = vpack.c.bf16 %v372, %v368
    %v385 = vpack.c.bf16 %v373, %v369
    %v386 = vpack.c.bf16 %v374, %v370
    %v387 = vpack.c.bf16 %v375, %v371
    %v388 = vpack.c.bf16 %v380, %v376
    %v389 = vpack.c.bf16 %v381, %v377
    %v390 = vpack.c.bf16 %v382, %v378
    %v391 = vpack.c.bf16 %v383, %v379
    %v392 = vpack.c.bf16 %v321, %v321
    %v393 = vpack.c.bf16 %v322, %v322
    %v394 = vpack.c.bf16 %v331, %v331
    %v395 = vpack.c.bf16 %v332, %v332
    %v396 = vld [vmem:[%s2] sm:$0xff]
    %398 = vset.pattern.permute.xlu0 0
    %399 = vperm.xlu0 %398, %v396
    %v400 = vpop.permute.xlu0 %399
    %vm402 = vcmask 293888
    %v404 = vsel %vm402, %v79, 0
    %vm406 = vcmask 1041408
    %v408 = vsel %vm406, %v392, 0
    %v411 = vsel %vm406, %v393, 0
    %v414 = vsel %vm406, %v394, 0
    %v417 = vsel %vm406, %v395, 0
    %419 = vmatprep.subr.bf16.mxu0 0
    %420 = vmatpush1.bf16.msra.mxu0 0
    %421 = vmatprep.subr.bf16.mxu0 0
    %422 = vmatpush1.bf16.msra.mxu0 0
    %423 = vmatprep.subr.bf16.mxu0 0
    %424 = vmatpush1.bf16.msra.mxu0 0
    %425 = vmatprep.subr.bf16.mxu0 0
    %426 = vmatpush1.bf16.msra.mxu0 0
    %427 = vmatprep.subr.bf16.mxu0 0
    %428 = vmatpush1.bf16.msra.mxu0 0
    %429 = vmatprep.subr.bf16.mxu0 %v411
    %430 = vmatpush1.bf16.msra.mxu0 %v408
    %431 = vmatprep.subr.bf16.mxu0 %v389
    %432 = vmatpush1.bf16.msra.mxu0 %v388
    %433 = vmatprep.subr.bf16.mxu0 %v385
    %434 = vmatpush1.bf16.msra.mxu0 %v384
    %435 = vmatprep.subr.bf16.mxu0 0
    %436 = vmatpush2.bf16.msra.mxu0 0
    %437 = vmatprep.subr.bf16.mxu0 0
    %438 = vmatpush2.bf16.msra.mxu0 0
    %439 = vmatprep.subr.bf16.mxu0 0
    %440 = vmatpush2.bf16.msra.mxu0 0
    %441 = vmatprep.subr.bf16.mxu0 0
    %442 = vmatpush2.bf16.msra.mxu0 0
    %443 = vmatprep.subr.bf16.mxu0 0
    %444 = vmatpush2.bf16.msra.mxu0 0
    %445 = vmatprep.subr.bf16.mxu0 0
    %446 = vmatpush2.bf16.msra.mxu0 0
    %447 = vmatprep.subr.bf16.mxu0 0
    %448 = vmatpush2.bf16.msra.mxu0 0
    %449 = vmatprep.subr.bf16.mxu0 0
    %450 = vmatpush2.bf16.msra.mxu0 0
    %451 = vmatprep.mubr.bf16.mxu0 0
    %452 = vmatmul.mubr.bf16.gmra.mxu0 %v404
    %v453 = vpop.f32.mrf.mxu0
    %v454 = vadd.f32 %v400, %v453
    %v455 = vpop.f32.mrf.mxu0
    %v456 = vadd.f32 %v400, %v455
    %v457 = vpop.f32.mrf.mxu0
    %v458 = vpop.f32.mrf.mxu0
    %459 = vdwg.mxu0
    %460 = vmatprep.subr.bf16.mxu0 0
    %461 = vmatpush1.bf16.msra.mxu0 0
    %462 = vmatprep.subr.bf16.mxu0 0
    %463 = vmatpush1.bf16.msra.mxu0 0
    %464 = vmatprep.subr.bf16.mxu0 0
    %465 = vmatpush1.bf16.msra.mxu0 0
    %466 = vmatprep.subr.bf16.mxu0 0
    %467 = vmatpush1.bf16.msra.mxu0 0
    %468 = vmatprep.subr.bf16.mxu0 0
    %469 = vmatpush1.bf16.msra.mxu0 0
    %470 = vmatprep.subr.bf16.mxu0 %v417
    %471 = vmatpush1.bf16.msra.mxu0 %v414
    %472 = vmatprep.subr.bf16.mxu0 %v391
    %473 = vmatpush1.bf16.msra.mxu0 %v390
    %474 = vmatprep.subr.bf16.mxu0 %v387
    %475 = vmatpush1.bf16.msra.mxu0 %v386
    %476 = vmatprep.subr.bf16.mxu0 0
    %477 = vmatpush2.bf16.msra.mxu0 0
    %478 = vmatprep.subr.bf16.mxu0 0
    %479 = vmatpush2.bf16.msra.mxu0 0
    %480 = vmatprep.subr.bf16.mxu0 0
    %481 = vmatpush2.bf16.msra.mxu0 0
    %482 = vmatprep.subr.bf16.mxu0 0
    %483 = vmatpush2.bf16.msra.mxu0 0
    %484 = vmatprep.subr.bf16.mxu0 0
    %485 = vmatpush2.bf16.msra.mxu0 0
    %486 = vmatprep.subr.bf16.mxu0 0
    %487 = vmatpush2.bf16.msra.mxu0 0
    %488 = vmatprep.subr.bf16.mxu0 0
    %489 = vmatpush2.bf16.msra.mxu0 0
    %490 = vmatprep.subr.bf16.mxu0 0
    %491 = vmatpush2.bf16.msra.mxu0 0
    %492 = vmatprep.mubr.bf16.mxu0 0
    %493 = vmatmul.mubr.bf16.gmra.mxu0 %v404
    %v494 = vpop.f32.mrf.mxu0
    %v495 = vadd.f32 %v400, %v494
    %v496 = vpop.f32.mrf.mxu0
    %v497 = vadd.f32 %v400, %v496
    %v498 = vpop.f32.mrf.mxu0
    %v499 = vpop.f32.mrf.mxu0
    %500 = vdwg.mxu0
    %v501 = vmax.f32 %v454, 0.0
    %v502 = vmax.f32 %v456, 0.0
    %v503 = vmax.f32 %v495, 0.0
    %v504 = vmax.f32 %v497, 0.0
    %v505 = vld [vmem:[%s3] sm:$0x3]
    %v506 = vmul.f32 %v501, %v93
    %v507 = vmul.f32 %v502, %v91
    %v508 = vmul.f32 %v503, %v93
    %v509 = vmul.f32 %v504, %v91
    %512 = vrot.lane.b32.xlu0 %v506, 17
    %v513 = vpop.permute.xlu0 %512
    %514 = vrot.lane.b32.xlu0 %v507, 17
    %v515 = vpop.permute.xlu0 %514
    %v516 = vsel %vm111, %v106, %v513
    %v517 = vsel %vm111, %v513, %v515
    %522 = vrot.lane.b32.xlu0 %v508, 17
    %v523 = vpop.permute.xlu0 %522
    %524 = vrot.lane.b32.xlu0 %v509, 17
    %v525 = vpop.permute.xlu0 %524
    %v526 = vsel %vm111, %v106, %v523
    %v527 = vsel %vm111, %v523, %v525
    %532 = vrot.lane.b32.xlu0 %v501, 16
    %v533 = vpop.permute.xlu0 %532
    %534 = vrot.lane.b32.xlu0 %v502, 16
    %v535 = vpop.permute.xlu0 %534
    %v536 = vsel %vm133, %v128, %v533
    %v537 = vsel %vm133, %v533, %v535
    %542 = vrot.lane.b32.xlu0 %v503, 16
    %v543 = vpop.permute.xlu0 %542
    %544 = vrot.lane.b32.xlu0 %v504, 16
    %v545 = vpop.permute.xlu0 %544
    %v546 = vsel %vm133, %v128, %v543
    %v547 = vsel %vm133, %v543, %v545
    %v550 = vmul.f32 %v501, %v149
    %v551 = vmul.f32 %v502, %v147
    %v552 = vmul.f32 %v503, %v149
    %v553 = vmul.f32 %v504, %v147
    %556 = vrot.lane.b32.xlu0 %v550, 15
    %v557 = vpop.permute.xlu0 %556
    %558 = vrot.lane.b32.xlu0 %v551, 15
    %v559 = vpop.permute.xlu0 %558
    %v560 = vsel %vm167, %v162, %v557
    %v561 = vsel %vm167, %v557, %v559
    %566 = vrot.lane.b32.xlu0 %v552, 15
    %v567 = vpop.permute.xlu0 %566
    %568 = vrot.lane.b32.xlu0 %v553, 15
    %v569 = vpop.permute.xlu0 %568
    %v570 = vsel %vm167, %v162, %v567
    %v571 = vsel %vm167, %v567, %v569
    %v574 = vmul.f32 %v501, %v187
    %v575 = vmul.f32 %v502, %v185
    %v576 = vmul.f32 %v503, %v187
    %v577 = vmul.f32 %v504, %v185
    %580 = vrot.lane.b32.xlu0 %v574, 1
    %v581 = vpop.permute.xlu0 %580
    %582 = vrot.lane.b32.xlu0 %v575, 1
    %v583 = vpop.permute.xlu0 %582
    %v584 = vsel %vm205, %v200, %v581
    %v585 = vsel %vm205, %v581, %v583
    %590 = vrot.lane.b32.xlu0 %v576, 1
    %v591 = vpop.permute.xlu0 %590
    %592 = vrot.lane.b32.xlu0 %v577, 1
    %v593 = vpop.permute.xlu0 %592
    %v594 = vsel %vm205, %v200, %v591
    %v595 = vsel %vm205, %v591, %v593
    %v598 = vmul.f32 %v501, %v217
    %v599 = vmul.f32 %v502, %v220
    %v600 = vmul.f32 %v503, %v217
    %v601 = vmul.f32 %v504, %v220
    %604 = vrot.lane.b32.xlu0 %v598, 127
    %v605 = vpop.permute.xlu0 %604
    %606 = vrot.lane.b32.xlu0 %v599, 127
    %v607 = vpop.permute.xlu0 %606
    %v608 = vsel %vm186, %v605, %v607
    %v609 = vsel %vm186, %v607, %v237
    %614 = vrot.lane.b32.xlu0 %v600, 127
    %v615 = vpop.permute.xlu0 %614
    %616 = vrot.lane.b32.xlu0 %v601, 127
    %v617 = vpop.permute.xlu0 %616
    %v618 = vsel %vm186, %v615, %v617
    %v619 = vsel %vm186, %v617, %v237
    %v622 = vmul.f32 %v501, %v249
    %v623 = vmul.f32 %v502, %v252
    %v624 = vmul.f32 %v503, %v249
    %v625 = vmul.f32 %v504, %v252
    %628 = vrot.lane.b32.xlu0 %v622, 113
    %v629 = vpop.permute.xlu0 %628
    %630 = vrot.lane.b32.xlu0 %v623, 113
    %v631 = vpop.permute.xlu0 %630
    %v632 = vsel %vm148, %v629, %v631
    %v633 = vsel %vm148, %v631, %v269
    %638 = vrot.lane.b32.xlu0 %v624, 113
    %v639 = vpop.permute.xlu0 %638
    %640 = vrot.lane.b32.xlu0 %v625, 113
    %v641 = vpop.permute.xlu0 %640
    %v642 = vsel %vm148, %v639, %v641
    %v643 = vsel %vm148, %v641, %v269
    %646 = vrot.lane.b32.xlu0 %v501, 112
    %v647 = vpop.permute.xlu0 %646
    %648 = vrot.lane.b32.xlu0 %v502, 112
    %v649 = vpop.permute.xlu0 %648
    %v650 = vsel %vm290, %v647, %v649
    %v651 = vsel %vm290, %v649, %v289
    %654 = vrot.lane.b32.xlu0 %v503, 112
    %v655 = vpop.permute.xlu0 %654
    %656 = vrot.lane.b32.xlu0 %v504, 112
    %v657 = vpop.permute.xlu0 %656
    %v658 = vsel %vm290, %v655, %v657
    %v659 = vsel %vm290, %v657, %v289
    %v662 = vmul.f32 %v501, %v300
    %v663 = vmul.f32 %v502, %v303
    %v664 = vmul.f32 %v503, %v300
    %v665 = vmul.f32 %v504, %v303
    %668 = vrot.lane.b32.xlu0 %v662, 111
    %v669 = vpop.permute.xlu0 %668
    %670 = vrot.lane.b32.xlu0 %v663, 111
    %v671 = vpop.permute.xlu0 %670
    %v672 = vsel %vm92, %v669, %v671
    %v673 = vsel %vm92, %v671, %v320
    %678 = vrot.lane.b32.xlu0 %v664, 111
    %v679 = vpop.permute.xlu0 %678
    %680 = vrot.lane.b32.xlu0 %v665, 111
    %v681 = vpop.permute.xlu0 %680
    %v682 = vsel %vm92, %v679, %v681
    %v683 = vsel %vm92, %v681, %v320
    %v686 = vpack.c.bf16 %v536, %v516
    %v687 = vpack.c.bf16 %v537, %v517
    %v688 = vpack.c.bf16 %v546, %v526
    %v689 = vpack.c.bf16 %v547, %v527
    %v690 = vpack.c.bf16 %v584, %v560
    %v691 = vpack.c.bf16 %v585, %v561
    %v692 = vpack.c.bf16 %v594, %v570
    %v693 = vpack.c.bf16 %v595, %v571
    %v694 = vpack.c.bf16 %v608, %v501
    %v695 = vpack.c.bf16 %v609, %v502
    %v696 = vpack.c.bf16 %v618, %v503
    %v697 = vpack.c.bf16 %v619, %v504
    %v698 = vpack.c.bf16 %v650, %v632
    %v699 = vpack.c.bf16 %v651, %v633
    %v700 = vpack.c.bf16 %v658, %v642
    %v701 = vpack.c.bf16 %v659, %v643
    %v702 = vpack.c.bf16 %v672, %v672
    %v703 = vpack.c.bf16 %v673, %v673
    %v704 = vpack.c.bf16 %v682, %v682
    %v705 = vpack.c.bf16 %v683, %v683
    %v706 = vld [vmem:[%s4] sm:$0xf]
    %708 = vset.pattern.permute.xlu0 0
    %709 = vperm.xlu0 %708, %v706
    %v710 = vpop.permute.xlu0 %709
    %vm712 = vcmask 588800
    %v714 = vsel %vm712, %v505, 0
    %v717 = vsel %vm367, %v702, 0
    %v720 = vsel %vm367, %v703, 0
    %v723 = vsel %vm367, %v704, 0
    %v726 = vsel %vm367, %v705, 0
    %728 = vmatprep.subr.bf16.mxu0 0
    %729 = vmatpush1.bf16.msra.mxu0 0
    %730 = vmatprep.subr.bf16.mxu0 0
    %731 = vmatpush1.bf16.msra.mxu0 0
    %732 = vmatprep.subr.bf16.mxu0 0
    %733 = vmatpush1.bf16.msra.mxu0 0
    %734 = vmatprep.subr.bf16.mxu0 %v720
    %735 = vmatpush1.bf16.msra.mxu0 %v717
    %736 = vmatprep.subr.bf16.mxu0 %v699
    %737 = vmatpush1.bf16.msra.mxu0 %v698
    %738 = vmatprep.subr.bf16.mxu0 %v695
    %739 = vmatpush1.bf16.msra.mxu0 %v694
    %740 = vmatprep.subr.bf16.mxu0 %v691
    %741 = vmatpush1.bf16.msra.mxu0 %v690
    %742 = vmatprep.subr.bf16.mxu0 %v687
    %743 = vmatpush1.bf16.msra.mxu0 %v686
    %744 = vmatprep.subr.bf16.mxu0 0
    %745 = vmatpush2.bf16.msra.mxu0 0
    %746 = vmatprep.subr.bf16.mxu0 0
    %747 = vmatpush2.bf16.msra.mxu0 0
    %748 = vmatprep.subr.bf16.mxu0 0
    %749 = vmatpush2.bf16.msra.mxu0 0
    %750 = vmatprep.subr.bf16.mxu0 0
    %751 = vmatpush2.bf16.msra.mxu0 0
    %752 = vmatprep.subr.bf16.mxu0 0
    %753 = vmatpush2.bf16.msra.mxu0 0
    %754 = vmatprep.subr.bf16.mxu0 0
    %755 = vmatpush2.bf16.msra.mxu0 0
    %756 = vmatprep.subr.bf16.mxu0 0
    %757 = vmatpush2.bf16.msra.mxu0 0
    %758 = vmatprep.subr.bf16.mxu0 0
    %759 = vmatpush2.bf16.msra.mxu0 0
    %760 = vmatprep.mubr.bf16.mxu0 0
    %761 = vmatmul.mubr.bf16.gmra.mxu0 %v714
    %v762 = vpop.f32.mrf.mxu0
    %v763 = vadd.f32 %v710, %v762
    %v764 = vpop.f32.mrf.mxu0
    %v765 = vadd.f32 %v710, %v764
    %v766 = vpop.f32.mrf.mxu0
    %v767 = vpop.f32.mrf.mxu0
    %768 = vdwg.mxu0
    %769 = vmatprep.subr.bf16.mxu0 0
    %770 = vmatpush1.bf16.msra.mxu0 0
    %771 = vmatprep.subr.bf16.mxu0 0
    %772 = vmatpush1.bf16.msra.mxu0 0
    %773 = vmatprep.subr.bf16.mxu0 0
    %774 = vmatpush1.bf16.msra.mxu0 0
    %775 = vmatprep.subr.bf16.mxu0 %v726
    %776 = vmatpush1.bf16.msra.mxu0 %v723
    %777 = vmatprep.subr.bf16.mxu0 %v701
    %778 = vmatpush1.bf16.msra.mxu0 %v700
    %779 = vmatprep.subr.bf16.mxu0 %v697
    %780 = vmatpush1.bf16.msra.mxu0 %v696
    %781 = vmatprep.subr.bf16.mxu0 %v693
    %782 = vmatpush1.bf16.msra.mxu0 %v692
    %783 = vmatprep.subr.bf16.mxu0 %v689
    %784 = vmatpush1.bf16.msra.mxu0 %v688
    %785 = vmatprep.subr.bf16.mxu0 0
    %786 = vmatpush2.bf16.msra.mxu0 0
    %787 = vmatprep.subr.bf16.mxu0 0
    %788 = vmatpush2.bf16.msra.mxu0 0
    %789 = vmatprep.subr.bf16.mxu0 0
    %790 = vmatpush2.bf16.msra.mxu0 0
    %791 = vmatprep.subr.bf16.mxu0 0
    %792 = vmatpush2.bf16.msra.mxu0 0
    %793 = vmatprep.subr.bf16.mxu0 0
    %794 = vmatpush2.bf16.msra.mxu0 0
    %795 = vmatprep.subr.bf16.mxu0 0
    %796 = vmatpush2.bf16.msra.mxu0 0
    %797 = vmatprep.subr.bf16.mxu0 0
    %798 = vmatpush2.bf16.msra.mxu0 0
    %799 = vmatprep.subr.bf16.mxu0 0
    %800 = vmatpush2.bf16.msra.mxu0 0
    %801 = vmatprep.mubr.bf16.mxu0 0
    %802 = vmatmul.mubr.bf16.gmra.mxu0 %v714
    %v803 = vpop.f32.mrf.mxu0
    %v804 = vadd.f32 %v710, %v803
    %v805 = vpop.f32.mrf.mxu0
    %v806 = vadd.f32 %v710, %v805
    %v807 = vpop.f32.mrf.mxu0
    %v808 = vpop.f32.mrf.mxu0
    %809 = vdwg.mxu0
    %v810 = vadd.f32 %v763, %v77
    %v811 = vadd.f32 %v765, %v78
    %v812 = vadd.f32 %v804, %v82
    %v813 = vadd.f32 %v806, %v83
    %v816 = vrot.slane %v812, 4
    %v817 = vrot.slane %v813, 4
    %v820 = vsel %vm367, %v810, %v816
    %v821 = vsel %vm367, %v811, %v817
    %822 = vst [vmem:[#allocation5] sm:$0xff] %v820
    %823 = vst [vmem:[#allocation5 + $0x8] sm:$0xff] %v821
    // Predicated region
    $region26: #{tpu_custom_call.1} parent=1 // pred_check
      _
    $region27: #{tpu_custom_call.1} parent=1 // pred_check_branch
      %825 = sbr.rel (0) target = $region29
    $region28: #{tpu_custom_call.1} parent=1 // pred_region
      %s827 = ssub.s32 256, 256
      %828 = vsyncadd [#allocation4], %s827
      %s830 = sshll.u32 [#allocation5], 4
      %s831 = int_to_ptr.vmem [resolvable:$true] %s830
      %833 = dma.vmem_to_hbm [thread:$0]  %s831, 256, %s5, [#allocation4]
    $region29: #{tpu_custom_call.1} parent=1 // pred_fallthru
      _
    // Predicated region
    $region30: #{tpu_custom_call.1} parent=1 // pred_check
      _
    $region31: #{tpu_custom_call.1} parent=1 // pred_check_branch
      %835 = sbr.rel (0) target = $region33
    $region32: #{tpu_custom_call.1} parent=1 // pred_region
      %836 = dma.done [#allocation4], 256
    $region33: #{tpu_custom_call.1} parent=1 // pred_fallthru
      _
    %837 = vsyncpa [#allocation3], 1
    %838 = vsyncpa [#allocation4], 1

</llo_original>
